<compile_context>
chip_gen: v6e
topology: v6e:2x2x1
jax: 0.10.0
libtpu: 0.0.40
codegen_flags: <defaults>
</compile_context>

<pallas_src>
import jax
import jax.numpy as jnp
from jax.experimental import pallas as pl
from jax.experimental.pallas import tpu as pltpu


def logistic_kernel(x_ref, w_ref, b_ref, o_ref):
    # x_ref: (TN, K) VMEM (streamed), w_ref: (K, C) VMEM (tiny, resident),
    # b_ref: (1, 1) SMEM scalar, o_ref: (TN, C) VMEM.
    z = jnp.dot(x_ref[...], w_ref[...], preferred_element_type=jnp.float32)
    o_ref[...] = jax.nn.sigmoid(z + b_ref[0, 0]).astype(o_ref.dtype)


def _padded_row_bytes(k, itemsize):
    """Bytes one row of a (rows, k) VMEM tile really occupies (lane-padded)."""
    return ((k + 127) // 128) * 128 * itemsize


def logistic_model_forward(x, weight, bias, *, block_rows=None,
                           vmem_budget_bytes=8 * 1024 * 1024):
    """Forward pass of LogisticModel: sigmoid(x @ W^T + b).

    x:      (N, P) float array (kept in its native dtype -- kernel is HBM-bound)
    weight: (1, P) or (P,)  (torch nn.Linear(p, 1) layout)
    bias:   (1,) or scalar
    Returns (N, 1) float32.
    """
    n, p = x.shape
    dtype = x.dtype
    b = jnp.asarray(bias, jnp.float32).reshape(1, 1)   # scalar -> SMEM

    # ---- Choose layout -----------------------------------------------------
    if p < 128 and 128 % p == 0 and n % (128 // p) == 0:
        # Lane-packed path: fold G = 128/P rows into the 128-lane minor dim.
        g = 128 // p
        n_rows, k, out_cols = n // g, 128, g
        x_in = x.reshape(n_rows, 128)                                   # free reshape
        w_in = jnp.kron(jnp.eye(g, dtype=dtype),
                        weight.reshape(p, 1).astype(dtype))             # (128, G) block-diag
    else:
        # General path: plain (TN, P) @ (P, 1); W pre-transposed, no big-tile transpose.
        n_rows, k, out_cols = n, p, 1
        x_in = x
        w_in = weight.reshape(p, 1).astype(dtype)

    # ---- Tile selection (padding-aware VMEM accounting) ---------------------
    row_bytes = _padded_row_bytes(k, dtype.itemsize)
    if block_rows is None:
        block_rows = max(128, (vmem_budget_bytes // row_bytes) // 128 * 128)
    # Guarantee >= 2 grid steps when the batch is big enough (v7x megacore).
    if n_rows >= 256:
        block_rows = min(block_rows, max(128, (n_rows // 2) // 128 * 128))

    if block_rows >= n_rows:
        tn = n_rows            # single full-extent block; fits budget by construction
    else:
        tn = block_rows        # multiple of 128; ragged last block handled by cdiv
    grid = (pl.cdiv(n_rows, tn),)

    cost = pl.CostEstimate(
        flops=2 * n_rows * k * out_cols,
        transcendentals=n_rows * out_cols,
        bytes_accessed=(x_in.size + w_in.size) * dtype.itemsize + n_rows * out_cols * 4,
    )

    out = pl.pallas_call(
        logistic_kernel,
        out_shape=jax.ShapeDtypeStruct((n_rows, out_cols), jnp.float32),
        grid_spec=pltpu.PrefetchScalarGridSpec(
            num_scalar_prefetch=0,
            grid=grid,
            in_specs=[
                pl.BlockSpec((tn, k), lambda i: (i, 0)),                # stream x
                pl.BlockSpec((k, out_cols), lambda i: (0, 0)),          # resident W
                pl.BlockSpec(memory_space=pltpu.MemorySpace.SMEM),      # bias scalar
            ],
            out_specs=pl.BlockSpec((tn, out_cols), lambda i: (i, 0)),
        ),
        compiler_params=pltpu.CompilerParams(
            dimension_semantics=("parallel",),        # batch tiles are independent
            vmem_limit_bytes=32 * 1024 * 1024,        # declare footprint (v5e default is 16 MiB)
        ),
        cost_estimate=cost,
    )(x_in, w_in, b)

    # (N/G, G) -> (N, 1) (packed path) or (N, 1) -> (N, 1): contiguous, free.
    return out.reshape(n, 1)


if __name__ == "__main__":
    key = jax.random.PRNGKey(0)
    kx, kw, kb = jax.random.split(key, 3)

    # --- Lane-packed, multi-tile path: P = 32 (divides 128), grid = (4,). ---
    N, P = 2048, 32
    x = jax.random.normal(kx, (N, P), dtype=jnp.float32)
    weight = jax.random.normal(kw, (1, P), dtype=jnp.float32) * 0.1
    bias = jax.random.normal(kb, (1,), dtype=jnp.float32) * 0.1

    y = jax.block_until_ready(logistic_model_forward(x, weight, bias, block_rows=128))
    y_ref = jax.nn.sigmoid(x @ weight.T + bias)
    assert y.shape == (N, 1)
    assert jnp.allclose(y, y_ref, atol=1e-5, rtol=1e-5)

    # --- Small-batch packed path: single full block. ---
    x_small = x[:8]
    y_small = jax.block_until_ready(logistic_model_forward(x_small, weight, bias))
    assert y_small.shape == (8, 1)
    assert jnp.allclose(y_small, jax.nn.sigmoid(x_small @ weight.T + bias),
                        atol=1e-5, rtol=1e-5)

    # --- General path: P does not divide 128, ragged N (uneven last block). ---
    N2, P2 = 300, 24
    x2 = jax.random.normal(kx, (N2, P2), dtype=jnp.float32)
    w2 = jax.random.normal(kw, (1, P2), dtype=jnp.float32) * 0.1
    y2 = jax.block_until_ready(logistic_model_forward(x2, w2, bias))
    y2_ref = jax.nn.sigmoid(x2 @ w2.T + bias)
    assert y2.shape == (N2, 1)
    assert jnp.allclose(y2, y2_ref, atol=1e-5, rtol=1e-5)

    print("KERNEL_OK")
</pallas_src>

<mosaic_0001>
module attributes {stable_mosaic.version = 11 : i64} {
  func.func @logistic_kernel(%arg0: i32, %arg1: memref<128x128xf32, #tpu.memory_space<vmem>>, %arg2: memref<128x4xf32, #tpu.memory_space<vmem>>, %arg3: memref<1x1xf32, #tpu.memory_space<smem>>, %arg4: memref<128x4xf32, #tpu.memory_space<vmem>>) attributes {dimension_semantics = [#tpu.dimension_semantics<parallel>], iteration_bounds = array<i64: 4>, scalar_prefetch = 0 : i64, scratch_operands = 0 : i64, tpu.core_type = #tpu.core_type<tc>, window_params = [{transform_indices = @transform_0, window_bounds = array<i64: 128, 128>}, {pipeline_mode = #tpu.pipeline_mode<synchronous>, transform_indices = @transform_1, window_bounds = array<i64: 128, 4>}, {transform_indices = @transform_2, window_bounds = array<i64: 1, 1>}, {transform_indices = @transform_3, window_bounds = array<i64: 128, 4>}]} {
    %c0 = arith.constant 0 : index
    %c0_0 = arith.constant 0 : index
    %0 = vector.load %arg1[%c0, %c0_0] : memref<128x128xf32, #tpu.memory_space<vmem>>, vector<128x128xf32>
    %c0_1 = arith.constant 0 : index
    %c0_2 = arith.constant 0 : index
    %1 = vector.load %arg2[%c0_1, %c0_2] : memref<128x4xf32, #tpu.memory_space<vmem>>, vector<128x4xf32>
    %cst = arith.constant dense<0.000000e+00> : vector<128x4xf32>
    %2 = tpu.matmul %0, %1, %cst {dimension_numbers = #tpu.dot_dimension_numbers<[1], [0], [0], [1], [0, 0, 1, 1], [], []>} : vector<128x128xf32>, vector<128x4xf32>, vector<128x4xf32> -> vector<128x4xf32>
    %c0_3 = arith.constant 0 : index
    %c0_4 = arith.constant 0 : index
    %3 = memref.load %arg3[%c0_3, %c0_4] : memref<1x1xf32, #tpu.memory_space<smem>>
    %4 = vector.broadcast %3 : f32 to vector<128x4xf32>
    %5 = arith.addf %2, %4 : vector<128x4xf32>
    %6 = arith.negf %5 : vector<128x4xf32>
    %7 = math.exp %6 : vector<128x4xf32>
    %cst_5 = arith.constant 1.000000e+00 : f32
    %8 = vector.broadcast %cst_5 : f32 to vector<128x4xf32>
    %9 = arith.addf %8, %7 : vector<128x4xf32>
    %10 = arith.divf %8, %9 : vector<128x4xf32>
    %c0_6 = arith.constant 0 : index
    %c0_7 = arith.constant 0 : index
    %11 = vector.load %arg4[%c0_6, %c0_7] : memref<128x4xf32, #tpu.memory_space<vmem>>, vector<128x4xf32>
    tpu.vector_store %arg4[%c0_6, %c0_7], %10 {strides = array<i32>} : memref<128x4xf32, #tpu.memory_space<vmem>>, vector<128x4xf32>,
    return
  }
  func.func @transform_0(%arg0: i32) -> (i32, i32) {
    %c0_i32 = arith.constant 0 : i32
    %c0_i32_0 = arith.constant 0 : i32
    return %arg0, %c0_i32 : i32, i32
  }
  func.func @transform_1(%arg0: i32) -> (i32, i32) {
    %c0_i32 = arith.constant 0 : i32
    %c0_i32_0 = arith.constant 0 : i32
    %c0_i32_1 = arith.constant 0 : i32
    return %c0_i32, %c0_i32_0 : i32, i32
  }
  func.func @transform_2(%arg0: i32) -> (i32, i32) {
    %c0_i32 = arith.constant 0 : i32
    %c0_i32_0 = arith.constant 0 : i32
    %c0_i32_1 = arith.constant 0 : i32
    return %c0_i32, %c0_i32_0 : i32, i32
  }
  func.func @transform_3(%arg0: i32) -> (i32, i32) {
    %c0_i32 = arith.constant 0 : i32
    %c0_i32_0 = arith.constant 0 : i32
    return %arg0, %c0_i32 : i32, i32
  }
}

</mosaic_0001>

<llo_original>
// kernel: tpu_custom_call.1
$region0: #{tpu_custom_call.1}
  #allocation0 [shape = 'u32[]', space=smem, size = 0x4, offset = 0x4, fixed_abs, tag = 'smem constant byte address 0x4 - core index']
  #allocation1 [shape = 'u32[144,128]{1,0:T(1,128)}', space=vmem, size = 0x12000, scoped, tag = 'internal scratch']
  #allocation2 [shape = 'f32[1,1]{1,0:T(1,128)S(6)}', space=smem, size = 0x200, scoped, tag = 'scoped memory for tpu_custom_call.1']
  %s0 = inlined_call_operand.hbm [shape: f32[512,128], index: 0, kind: input, shape index: {}]
  %s1 = inlined_call_operand.vmem [shape: f32[128,4], index: 1, kind: input, shape index: {}]
  %s2 = inlined_call_operand.<no memory space> [shape: f32[1,1], index: 2, kind: input, shape index: {}]
  %s3 = inlined_call_operand.vmem [shape: f32[512,4], index: 3, kind: output, shape index: {}]
  %s4 = sld [smem:[#allocation0]]
  $region49: #{tpu_custom_call.1} parent=0
    _
  %s6 = ssub.s32 1, %s4
  %s7 = scalar_select 0, %s6, %s4
  %8 = sst [smem:[#allocation2]] %s2
  $region1: #{tpu_custom_call.1} parent=0
    #allocation3 [shape = 'u8[131072]{0}', space=vmem, size = 0x20000, scoped, tag = 'input window, operand 0']
    #allocation4 [shape = 's32[2]{0}', space=sflag, size = 0x8, scoped, tag = 'scoped memory for tpu_custom_call.1']
    %9 = vsyncpa [#allocation4], 0
    %s10 = scalar_lea.sflag [#allocation4], 1
    %11 = vsyncpa %s10, 0
    loop: start=0, step=1, limit=6
    $region2: #{tpu_custom_call.1} parent=1 // loop_pre_header
      _
    $region3: #{tpu_custom_call.1} parent=1 // loop_header
      %s13 = sphi 0, %s17
      %p14 = scmp.ge.s32.totalorder %s13, 6
      %s23 = sphi 0, %s25
      %s26 = sphi 0, %s23
      %s27 = sphi 0, %s26
      %s43 = sphi 0, %s27
      %s47 = sphi 0, %s47
      %s49 = sphi 0, %s47
      %s50 = sphi 0, %s49
      %s64 = sphi 0, %s50
      %s68 = sphi 0, %s68
      %s70 = sphi 0, %s68
      %s71 = sphi 0, %s70
      %s85 = sphi 0, %s71
      %s91 = sphi 0, %s93
      %s94 = sphi 0, %s91
      %s95 = sphi 0, %s94
      %s111 = sphi 0, %s95
    $region4: #{tpu_custom_call.1} parent=1 // loop_header_branch
      %16 = sbr.rel (%p14) target = $region8
    $region5: #{tpu_custom_call.1} parent=1 // loop_body
      %s18 = ssub.s32 %s13, 1
      %s19 = ssub.s32 %s13, 2
      %s20 = sadd.s32 %s13, 1
      %s21 = ssub.s32 %s13, %s20
      %p22 = scmp.eq.s32.totalorder %s21, 0
      %s24 = sadd.s32 %s23, 1
      %s25 = scalar_select %p22, %s23, %s24
      %p28 = pneg %p22
      %p29 = scmp.eq.s32.totalorder %s13, 3
      %p30 = por %p28, %p29
      %p31 = scmp.ne.s32.totalorder %s23, %s26
      %p32 = scmp.eq.s32.totalorder %s13, 0
      %p33 = por %p31, %p32
      %p34 = scmp.ne.s32.totalorder %s23, %s26
      %p35 = scmp.eq.s32.totalorder %s18, 3
      %p36 = por %p34, %p35
      %p37 = scmp.ne.s32.totalorder %s26, %s27
      %p38 = scmp.eq.s32.totalorder %s18, 0
      %p39 = por %p37, %p38
      %p40 = scmp.ne.s32.totalorder %s26, %s27
      %p41 = scmp.eq.s32.totalorder %s19, 3
      %p42 = por %p40, %p41
      %p44 = scmp.ne.s32.totalorder %s27, %s43
      %p45 = scmp.eq.s32.totalorder %s19, 0
      %p46 = por %p44, %p45
      %s48 = sadd.s32 %s47, 1
      %p51 = scmp.eq.s32.totalorder %s13, 3
      %p52 = scmp.ne.s32.totalorder %s47, %s49
      %p53 = scmp.eq.s32.totalorder %s13, 0
      %p54 = por %p52, %p53
      %p55 = scmp.ne.s32.totalorder %s47, %s49
      %p56 = scmp.eq.s32.totalorder %s18, 3
      %p57 = por %p55, %p56
      %p58 = scmp.ne.s32.totalorder %s49, %s50
      %p59 = scmp.eq.s32.totalorder %s18, 0
      %p60 = por %p58, %p59
      %p61 = scmp.ne.s32.totalorder %s49, %s50
      %p62 = scmp.eq.s32.totalorder %s19, 3
      %p63 = por %p61, %p62
      %p65 = scmp.ne.s32.totalorder %s50, %s64
      %p66 = scmp.eq.s32.totalorder %s19, 0
      %p67 = por %p65, %p66
      %s69 = sadd.s32 %s68, 1
      %p72 = scmp.eq.s32.totalorder %s13, 3
      %p73 = scmp.ne.s32.totalorder %s68, %s70
      %p74 = scmp.eq.s32.totalorder %s13, 0
      %p75 = por %p73, %p74
      %p76 = scmp.ne.s32.totalorder %s68, %s70
      %p77 = scmp.eq.s32.totalorder %s18, 3
      %p78 = por %p76, %p77
      %p79 = scmp.ne.s32.totalorder %s70, %s71
      %p80 = scmp.eq.s32.totalorder %s18, 0
      %p81 = por %p79, %p80
      %p82 = scmp.ne.s32.totalorder %s70, %s71
      %p83 = scmp.eq.s32.totalorder %s19, 3
      %p84 = por %p82, %p83
      %p86 = scmp.ne.s32.totalorder %s71, %s85
      %p87 = scmp.eq.s32.totalorder %s19, 0
      %p88 = por %p86, %p87
      %s89 = ssub.s32 %s13, %s20
      %p90 = scmp.eq.s32.totalorder %s89, 0
      %s92 = sadd.s32 %s91, 1
      %s93 = scalar_select %p90, %s91, %s92
      %p96 = pneg %p90
      %p97 = scmp.eq.s32.totalorder %s13, 3
      %p98 = por %p96, %p97
      %p99 = scmp.ne.s32.totalorder %s91, %s94
      %p100 = scmp.eq.s32.totalorder %s13, 0
      %p101 = por %p99, %p100
      %p102 = scmp.ne.s32.totalorder %s91, %s94
      %p103 = scmp.eq.s32.totalorder %s18, 3
      %p104 = por %p102, %p103
      %p105 = scmp.ne.s32.totalorder %s94, %s95
      %p106 = scmp.eq.s32.totalorder %s18, 0
      %p107 = por %p105, %p106
      %p108 = scmp.ne.s32.totalorder %s94, %s95
      %p109 = scmp.eq.s32.totalorder %s19, 3
      %p110 = por %p108, %p109
      %p112 = scmp.ne.s32.totalorder %s95, %s111
      %p113 = scmp.eq.s32.totalorder %s19, 0
      %p114 = por %p112, %p113
      %p115 = scmp.le.s32.totalorder 1, %s13
      %p116 = scmp.lt.s32.totalorder %s13, 5
      %p117 = pnand %p115, %p116
      %p118 = pneg %p117
      // Predicated region
      $region9: #{tpu_custom_call.1} parent=5 // pred_check
        _
      $region10: #{tpu_custom_call.1} parent=5 // pred_check_branch
        %120 = sbr.rel (%p117) target = $region12
      $region11: #{tpu_custom_call.1} parent=5 // pred_region
        %s121 = ssub.s32 %s13, 1
        // Predicated region
        $region13: #{tpu_custom_call.1} parent=11 // pred_check
          %p122 = pneg %p60
        $region14: #{tpu_custom_call.1} parent=11 // pred_check_branch
          %124 = sbr.rel (%p122) target = $region16
        $region15: #{tpu_custom_call.1} parent=11 // pred_region
          _
        $region16: #{tpu_custom_call.1} parent=11 // pred_fallthru
          _
        // Predicated region
        $region17: #{tpu_custom_call.1} parent=11 // pred_check
          %p125 = pneg %p81
        $region18: #{tpu_custom_call.1} parent=11 // pred_check_branch
          %127 = sbr.rel (%p125) target = $region20
        $region19: #{tpu_custom_call.1} parent=11 // pred_region
          _
        $region20: #{tpu_custom_call.1} parent=11 // pred_fallthru
          _
      $region12: #{tpu_custom_call.1} parent=5 // pred_fallthru
        _
      %p128 = scmp.lt.s32.totalorder %s13, 4
      // Predicated region
      $region21: #{tpu_custom_call.1} parent=5 // pred_check
        %p129 = pneg %p128
      $region22: #{tpu_custom_call.1} parent=5 // pred_check_branch
        %131 = sbr.rel (%p129) target = $region24
      $region23: #{tpu_custom_call.1} parent=5 // pred_region
        // Predicated region
        $region25: #{tpu_custom_call.1} parent=23 // pred_check
          %p132 = pneg %p33
        $region26: #{tpu_custom_call.1} parent=23 // pred_check_branch
          %134 = sbr.rel (%p132) target = $region28
        $region27: #{tpu_custom_call.1} parent=23 // pred_region
          %s135 = sand.u32 %s23, 1
          %s136 = scalar_lea.sflag [#allocation4], %s135
          %s137 = sand.u32 %s23, 1
          %s138 = smul.addr %s137, 128
          %s139 = scalar_lea.vmem [#allocation3], %s138
          %s140 = smul.u32 16, %s13
          %s142 = ssub.s32 2048, 2048
          %143 = vsyncadd %s136, %s142
          %s144 = smul.addr %s140, 128
          %s145 = scalar_lea.hbm %s0, %s144
          %s146 = sshll.u32 %s139, 4
          %s147 = int_to_ptr.vmem [resolvable:$true] %s146
          %152 = dma.hbm_to_vmem [thread:$0]  %s145, 2048, %s147, %s136, 128, 128, 8
        $region28: #{tpu_custom_call.1} parent=23 // pred_fallthru
          _
      $region24: #{tpu_custom_call.1} parent=5 // pred_fallthru
        _
      %p153 = scmp.le.s32.totalorder 1, %s13
      %p154 = scmp.lt.s32.totalorder %s13, 5
      %p155 = pnand %p153, %p154
      %p156 = pneg %p155
      // Predicated region
      $region29: #{tpu_custom_call.1} parent=5 // pred_check
        _
      $region30: #{tpu_custom_call.1} parent=5 // pred_check_branch
        %158 = sbr.rel (%p155) target = $region32
      $region31: #{tpu_custom_call.1} parent=5 // pred_region
        %s159 = ssub.s32 %s13, 1
        %s160 = sand.u32 %s26, 1
        %s161 = scalar_lea.sflag [#allocation4], %s160
        %s162 = sand.u32 %s26, 1
        %s163 = smul.addr %s162, 128
        %s164 = scalar_lea.vmem [#allocation3], %s163
        // Predicated region
        $region33: #{tpu_custom_call.1} parent=31 // pred_check
          %p165 = pneg %p39
        $region34: #{tpu_custom_call.1} parent=31 // pred_check_branch
          %167 = sbr.rel (%p165) target = $region36
        $region35: #{tpu_custom_call.1} parent=31 // pred_region
          %168 = dma.done %s161, 2048
        $region36: #{tpu_custom_call.1} parent=31 // pred_fallthru
          _
        %s169 = sand.u32 %s26, 1
        %s170 = scalar_lea.sflag [#allocation4], %s169
        %s171 = sand.u32 %s26, 1
        %s172 = smul.addr %s171, 128
        %s173 = scalar_lea.vmem [#allocation3], %s172
        %p174 = pneg %p39
        %p175 = pneg %p36
        %p176 = pneg %p60
        %p177 = pneg %p57
        %p178 = pneg %p81
        %p179 = pneg %p78
        %p180 = pneg %p107
        %p181 = pneg %p104
        %s182 = smul.u32 16, %s18
        %p183 = scmp.lt.s32.totalorder %s182, 63
        %s184 = scalar_select %p183, %s182, 63
        %s185 = smul.addr %s184, 8
        %s186 = scalar_lea.vmem %s3, %s185
        %s187 = smul.u32 16, %s18
        %s188 = smul.u32 16, %s18
        %p189 = scmp.lt.s32.totalorder %s188, 63
        %s190 = scalar_select %p189, %s188, 63
        %s191 = smul.addr %s190, 8
        %s192 = scalar_lea.vmem %s3, %s191
        %s193 = smul.u32 16, %s18
        %v194 = vld [vmem:[%s164] sm:$0xff]
        %v195 = vld [vmem:[%s164 + $0x8] sm:$0xff]
        %v196 = vld [vmem:[%s164 + $0x10] sm:$0xff]
        %v197 = vld [vmem:[%s164 + $0x18] sm:$0xff]
        %v198 = vld [vmem:[%s164 + $0x20] sm:$0xff]
        %v199 = vld [vmem:[%s164 + $0x28] sm:$0xff]
        %v200 = vld [vmem:[%s164 + $0x30] sm:$0xff]
        %v201 = vld [vmem:[%s164 + $0x38] sm:$0xff]
        %v202 = vld [vmem:[%s164 + $0x40] sm:$0xff]
        %v203 = vld [vmem:[%s164 + $0x48] sm:$0xff]
        %v204 = vld [vmem:[%s164 + $0x50] sm:$0xff]
        %v205 = vld [vmem:[%s164 + $0x58] sm:$0xff]
        %v206 = vld [vmem:[%s164 + $0x60] sm:$0xff]
        %v207 = vld [vmem:[%s164 + $0x68] sm:$0xff]
        %v208 = vld [vmem:[%s164 + $0x70] sm:$0xff]
        %v209 = vld [vmem:[%s164 + $0x78] sm:$0xff]
        %v210 = vld [vmem:[%s1] sm:$0xff]
        %v211 = vld [vmem:[%s1 + $0x8] sm:$0xff]
        %v212 = vld [vmem:[%s1 + $0x10] sm:$0xff]
        %v213 = vld [vmem:[%s1 + $0x18] sm:$0xff]
        %v214 = vld [vmem:[%s1 + $0x20] sm:$0xff]
        %v215 = vld [vmem:[%s1 + $0x28] sm:$0xff]
        %v216 = vld [vmem:[%s1 + $0x30] sm:$0xff]
        %v217 = vld [vmem:[%s1 + $0x38] sm:$0xff]
        %v218 = vld [vmem:[%s1 + $0x40] sm:$0xff]
        %v219 = vld [vmem:[%s1 + $0x48] sm:$0xff]
        %v220 = vld [vmem:[%s1 + $0x50] sm:$0xff]
        %v221 = vld [vmem:[%s1 + $0x58] sm:$0xff]
        %v222 = vld [vmem:[%s1 + $0x60] sm:$0xff]
        %v223 = vld [vmem:[%s1 + $0x68] sm:$0xff]
        %v224 = vld [vmem:[%s1 + $0x70] sm:$0xff]
        %v225 = vld [vmem:[%s1 + $0x78] sm:$0xff]
        %s226 = sld [smem:[#allocation2]]
        %v227 = vstv %s226
        %228 = vmatprep.subr.mxu0 0.0
        %229 = vmatpush1.msra.mxu0 %v225
        %230 = vmatprep.subr.mxu0 0.0
        %231 = vmatpush1.msra.mxu0 %v224
        %232 = vmatprep.subr.mxu0 0.0
        %233 = vmatpush1.msra.mxu0 %v223
        %234 = vmatprep.subr.mxu0 0.0
        %235 = vmatpush1.msra.mxu0 %v222
        %236 = vmatprep.subr.mxu0 0.0
        %237 = vmatpush1.msra.mxu0 %v221
        %238 = vmatprep.subr.mxu0 0.0
        %239 = vmatpush1.msra.mxu0 %v220
        %240 = vmatprep.subr.mxu0 0.0
        %241 = vmatpush1.msra.mxu0 %v219
        %242 = vmatprep.subr.mxu0 0.0
        %243 = vmatpush1.msra.mxu0 %v218
        %244 = vmatprep.subr.mxu0 0.0
        %245 = vmatpush1.msra.mxu0 %v217
        %246 = vmatprep.subr.mxu0 0.0
        %247 = vmatpush1.msra.mxu0 %v216
        %248 = vmatprep.subr.mxu0 0.0
        %249 = vmatpush1.msra.mxu0 %v215
        %250 = vmatprep.subr.mxu0 0.0
        %251 = vmatpush1.msra.mxu0 %v214
        %252 = vmatprep.subr.mxu0 0.0
        %253 = vmatpush1.msra.mxu0 %v213
        %254 = vmatprep.subr.mxu0 0.0
        %255 = vmatpush1.msra.mxu0 %v212
        %256 = vmatprep.subr.mxu0 0.0
        %257 = vmatpush1.msra.mxu0 %v211
        %258 = vmatprep.subr.mxu0 0.0
        %259 = vmatpush1.msra.mxu0 %v210
        %260 = vmatprep.subr.mxu0 0.0
        %261 = vmatpush2.msra.mxu0 0.0
        %262 = vmatprep.subr.mxu0 0.0
        %263 = vmatpush2.msra.mxu0 0.0
        %264 = vmatprep.subr.mxu0 0.0
        %265 = vmatpush2.msra.mxu0 0.0
        %266 = vmatprep.subr.mxu0 0.0
        %267 = vmatpush2.msra.mxu0 0.0
        %268 = vmatprep.subr.mxu0 0.0
        %269 = vmatpush2.msra.mxu0 0.0
        %270 = vmatprep.subr.mxu0 0.0
        %271 = vmatpush2.msra.mxu0 0.0
        %272 = vmatprep.subr.mxu0 0.0
        %273 = vmatpush2.msra.mxu0 0.0
        %274 = vmatprep.subr.mxu0 0.0
        %275 = vmatpush2.msra.mxu0 0.0
        %276 = vmatprep.subr.mxu0 0.0
        %277 = vmatpush2.msra.mxu0 0.0
        %278 = vmatprep.subr.mxu0 0.0
        %279 = vmatpush2.msra.mxu0 0.0
        %280 = vmatprep.subr.mxu0 0.0
        %281 = vmatpush2.msra.mxu0 0.0
        %282 = vmatprep.subr.mxu0 0.0
        %283 = vmatpush2.msra.mxu0 0.0
        %284 = vmatprep.subr.mxu0 0.0
        %285 = vmatpush2.msra.mxu0 0.0
        %286 = vmatprep.subr.mxu0 0.0
        %287 = vmatpush2.msra.mxu0 0.0
        %288 = vmatprep.subr.mxu0 0.0
        %289 = vmatpush2.msra.mxu0 0.0
        %290 = vmatprep.subr.mxu0 0.0
        %291 = vmatpush2.msra.mxu0 0.0
        %292 = vmatprep.mubr.f32.mxu0 0.0
        %293 = vmatmul.mubr.f32.gmra.mxu0 %v194
        %v294 = vpop.f32.mrf.mxu0
        %v295 = vadd.f32 %v227, %v294
        %v296 = vpop.f32.mrf.mxu0
        %297 = vmatprep.mubr.f32.mxu0 0.0
        %298 = vmatmul.mubr.f32.gmra.mxu0 %v195
        %v299 = vpop.f32.mrf.mxu0
        %v300 = vadd.f32 %v227, %v299
        %v301 = vpop.f32.mrf.mxu0
        %302 = vmatprep.mubr.f32.mxu0 0.0
        %303 = vmatmul.mubr.f32.gmra.mxu0 %v196
        %v304 = vpop.f32.mrf.mxu0
        %v305 = vadd.f32 %v227, %v304
        %v306 = vpop.f32.mrf.mxu0
        %307 = vmatprep.mubr.f32.mxu0 0.0
        %308 = vmatmul.mubr.f32.gmra.mxu0 %v197
        %v309 = vpop.f32.mrf.mxu0
        %v310 = vadd.f32 %v227, %v309
        %v311 = vpop.f32.mrf.mxu0
        %312 = vmatprep.mubr.f32.mxu0 0.0
        %313 = vmatmul.mubr.f32.gmra.mxu0 %v198
        %v314 = vpop.f32.mrf.mxu0
        %v315 = vadd.f32 %v227, %v314
        %v316 = vpop.f32.mrf.mxu0
        %317 = vmatprep.mubr.f32.mxu0 0.0
        %318 = vmatmul.mubr.f32.gmra.mxu0 %v199
        %v319 = vpop.f32.mrf.mxu0
        %v320 = vadd.f32 %v227, %v319
        %v321 = vpop.f32.mrf.mxu0
        %322 = vmatprep.mubr.f32.mxu0 0.0
        %323 = vmatmul.mubr.f32.gmra.mxu0 %v200
        %v324 = vpop.f32.mrf.mxu0
        %v325 = vadd.f32 %v227, %v324
        %v326 = vpop.f32.mrf.mxu0
        %327 = vmatprep.mubr.f32.mxu0 0.0
        %328 = vmatmul.mubr.f32.gmra.mxu0 %v201
        %v329 = vpop.f32.mrf.mxu0
        %v330 = vadd.f32 %v227, %v329
        %v331 = vpop.f32.mrf.mxu0
        %332 = vmatprep.mubr.f32.mxu0 0.0
        %333 = vmatmul.mubr.f32.gmra.mxu0 %v202
        %v334 = vpop.f32.mrf.mxu0
        %v335 = vadd.f32 %v227, %v334
        %v336 = vpop.f32.mrf.mxu0
        %337 = vmatprep.mubr.f32.mxu0 0.0
        %338 = vmatmul.mubr.f32.gmra.mxu0 %v203
        %v339 = vpop.f32.mrf.mxu0
        %v340 = vadd.f32 %v227, %v339
        %v341 = vpop.f32.mrf.mxu0
        %342 = vmatprep.mubr.f32.mxu0 0.0
        %343 = vmatmul.mubr.f32.gmra.mxu0 %v204
        %v344 = vpop.f32.mrf.mxu0
        %v345 = vadd.f32 %v227, %v344
        %v346 = vpop.f32.mrf.mxu0
        %347 = vmatprep.mubr.f32.mxu0 0.0
        %348 = vmatmul.mubr.f32.gmra.mxu0 %v205
        %v349 = vpop.f32.mrf.mxu0
        %v350 = vadd.f32 %v227, %v349
        %v351 = vpop.f32.mrf.mxu0
        %352 = vmatprep.mubr.f32.mxu0 0.0
        %353 = vmatmul.mubr.f32.gmra.mxu0 %v206
        %v354 = vpop.f32.mrf.mxu0
        %v355 = vadd.f32 %v227, %v354
        %v356 = vpop.f32.mrf.mxu0
        %357 = vmatprep.mubr.f32.mxu0 0.0
        %358 = vmatmul.mubr.f32.gmra.mxu0 %v207
        %v359 = vpop.f32.mrf.mxu0
        %v360 = vadd.f32 %v227, %v359
        %v361 = vpop.f32.mrf.mxu0
        %362 = vmatprep.mubr.f32.mxu0 0.0
        %363 = vmatmul.mubr.f32.gmra.mxu0 %v208
        %v364 = vpop.f32.mrf.mxu0
        %v365 = vadd.f32 %v227, %v364
        %v366 = vpop.f32.mrf.mxu0
        %367 = vmatprep.mubr.f32.mxu0 0.0
        %368 = vmatmul.mubr.f32.gmra.mxu0 %v209
        %v369 = vpop.f32.mrf.mxu0
        %v370 = vadd.f32 %v227, %v369
        %v371 = vpop.f32.mrf.mxu0
        %372 = vdwg.mxu0
        %v373 = vxor.u32 %v295, 2147483648
        %v374 = vxor.u32 %v300, 2147483648
        %v375 = vxor.u32 %v305, 2147483648
        %v376 = vxor.u32 %v310, 2147483648
        %v377 = vxor.u32 %v315, 2147483648
        %v378 = vxor.u32 %v320, 2147483648
        %v379 = vxor.u32 %v325, 2147483648
        %v380 = vxor.u32 %v330, 2147483648
        %v381 = vxor.u32 %v335, 2147483648
        %v382 = vxor.u32 %v340, 2147483648
        %v383 = vxor.u32 %v345, 2147483648
        %v384 = vxor.u32 %v350, 2147483648
        %v385 = vxor.u32 %v355, 2147483648
        %v386 = vxor.u32 %v360, 2147483648
        %v387 = vxor.u32 %v365, 2147483648
        %v388 = vxor.u32 %v370, 2147483648
        %v389 = vmul.f32 %v373, 1.442695
        %v390 = vpow.pop %v389
        %v391 = vmul.f32 %v374, 1.442695
        %v392 = vpow.pop %v391
        %v393 = vmul.f32 %v375, 1.442695
        %v394 = vpow.pop %v393
        %v395 = vmul.f32 %v376, 1.442695
        %v396 = vpow.pop %v395
        %v397 = vmul.f32 %v377, 1.442695
        %v398 = vpow.pop %v397
        %v399 = vmul.f32 %v378, 1.442695
        %v400 = vpow.pop %v399
        %v401 = vmul.f32 %v379, 1.442695
        %v402 = vpow.pop %v401
        %v403 = vmul.f32 %v380, 1.442695
        %v404 = vpow.pop %v403
        %v405 = vmul.f32 %v381, 1.442695
        %v406 = vpow.pop %v405
        %v407 = vmul.f32 %v382, 1.442695
        %v408 = vpow.pop %v407
        %v409 = vmul.f32 %v383, 1.442695
        %v410 = vpow.pop %v409
        %v411 = vmul.f32 %v384, 1.442695
        %v412 = vpow.pop %v411
        %v413 = vmul.f32 %v385, 1.442695
        %v414 = vpow.pop %v413
        %v415 = vmul.f32 %v386, 1.442695
        %v416 = vpow.pop %v415
        %v417 = vmul.f32 %v387, 1.442695
        %v418 = vpow.pop %v417
        %v419 = vmul.f32 %v388, 1.442695
        %v420 = vpow.pop %v419
        %v421 = vadd.f32 %v390, 1.0
        %v422 = vadd.f32 %v392, 1.0
        %v423 = vadd.f32 %v394, 1.0
        %v424 = vadd.f32 %v396, 1.0
        %v425 = vadd.f32 %v398, 1.0
        %v426 = vadd.f32 %v400, 1.0
        %v427 = vadd.f32 %v402, 1.0
        %v428 = vadd.f32 %v404, 1.0
        %v429 = vadd.f32 %v406, 1.0
        %v430 = vadd.f32 %v408, 1.0
        %v431 = vadd.f32 %v410, 1.0
        %v432 = vadd.f32 %v412, 1.0
        %v433 = vadd.f32 %v414, 1.0
        %v434 = vadd.f32 %v416, 1.0
        %v435 = vadd.f32 %v418, 1.0
        %v436 = vadd.f32 %v420, 1.0
        %v437 = vrcp.pop %v421
        %v438 = vmul.f32 1.0, %v437
        %v439 = vrcp.pop %v422
        %v440 = vmul.f32 1.0, %v439
        %v441 = vrcp.pop %v423
        %v442 = vmul.f32 1.0, %v441
        %v443 = vrcp.pop %v424
        %v444 = vmul.f32 1.0, %v443
        %v445 = vrcp.pop %v425
        %v446 = vmul.f32 1.0, %v445
        %v447 = vrcp.pop %v426
        %v448 = vmul.f32 1.0, %v447
        %v449 = vrcp.pop %v427
        %v450 = vmul.f32 1.0, %v449
        %v451 = vrcp.pop %v428
        %v452 = vmul.f32 1.0, %v451
        %v453 = vrcp.pop %v429
        %v454 = vmul.f32 1.0, %v453
        %v455 = vrcp.pop %v430
        %v456 = vmul.f32 1.0, %v455
        %v457 = vrcp.pop %v431
        %v458 = vmul.f32 1.0, %v457
        %v459 = vrcp.pop %v432
        %v460 = vmul.f32 1.0, %v459
        %v461 = vrcp.pop %v433
        %v462 = vmul.f32 1.0, %v461
        %v463 = vrcp.pop %v434
        %v464 = vmul.f32 1.0, %v463
        %v465 = vrcp.pop %v435
        %v466 = vmul.f32 1.0, %v465
        %v467 = vrcp.pop %v436
        %v468 = vmul.f32 1.0, %v467
        %vm469 = vcmask 31744
        %470 = vst.msk [vmem:[%s192] sm:$0xff] %vm469, %v438
        %471 = vst.msk [vmem:[%s192 + $0x8] sm:$0xff] %vm469, %v440
        %472 = vst.msk [vmem:[%s192 + $0x10] sm:$0xff] %vm469, %v442
        %473 = vst.msk [vmem:[%s192 + $0x18] sm:$0xff] %vm469, %v444
        %474 = vst.msk [vmem:[%s192 + $0x20] sm:$0xff] %vm469, %v446
        %475 = vst.msk [vmem:[%s192 + $0x28] sm:$0xff] %vm469, %v448
        %476 = vst.msk [vmem:[%s192 + $0x30] sm:$0xff] %vm469, %v450
        %477 = vst.msk [vmem:[%s192 + $0x38] sm:$0xff] %vm469, %v452
        %478 = vst.msk [vmem:[%s192 + $0x40] sm:$0xff] %vm469, %v454
        %479 = vst.msk [vmem:[%s192 + $0x48] sm:$0xff] %vm469, %v456
        %480 = vst.msk [vmem:[%s192 + $0x50] sm:$0xff] %vm469, %v458
        %481 = vst.msk [vmem:[%s192 + $0x58] sm:$0xff] %vm469, %v460
        %482 = vst.msk [vmem:[%s192 + $0x60] sm:$0xff] %vm469, %v462
        %483 = vst.msk [vmem:[%s192 + $0x68] sm:$0xff] %vm469, %v464
        %484 = vst.msk [vmem:[%s192 + $0x70] sm:$0xff] %vm469, %v466
        %485 = vst.msk [vmem:[%s192 + $0x78] sm:$0xff] %vm469, %v468
        %s486 = smul.u32 16, %s18
        %p487 = scmp.lt.s32.totalorder %s486, 63
        %s488 = scalar_select %p487, %s486, 63
        %s489 = smul.addr %s488, 8
        %s490 = scalar_lea.vmem %s3, %s489
        // Predicated region
        $region37: #{tpu_custom_call.1} parent=31 // pred_check
          %p491 = pneg %p104
        $region38: #{tpu_custom_call.1} parent=31 // pred_check_branch
          %493 = sbr.rel (%p491) target = $region40
        $region39: #{tpu_custom_call.1} parent=31 // pred_region
          %s494 = smul.u32 16, %s18
        $region40: #{tpu_custom_call.1} parent=31 // pred_fallthru
          _
      $region32: #{tpu_custom_call.1} parent=5 // pred_fallthru
        _
      %p495 = scmp.le.s32.totalorder 2, %s13
      // Predicated region
      $region41: #{tpu_custom_call.1} parent=5 // pred_check
        %p496 = pneg %p495
      $region42: #{tpu_custom_call.1} parent=5 // pred_check_branch
        %498 = sbr.rel (%p496) target = $region44
      $region43: #{tpu_custom_call.1} parent=5 // pred_region
        %s499 = ssub.s32 %s13, 2
        // Predicated region
        $region45: #{tpu_custom_call.1} parent=43 // pred_check
          %p500 = pneg %p110
        $region46: #{tpu_custom_call.1} parent=43 // pred_check_branch
          %502 = sbr.rel (%p500) target = $region48
        $region47: #{tpu_custom_call.1} parent=43 // pred_region
          %s503 = smul.u32 16, %s19
          %p504 = scmp.lt.s32.totalorder %s503, 63
          %s505 = scalar_select %p504, %s503, 63
          %s506 = smul.addr %s505, 8
          %s507 = scalar_lea.vmem %s3, %s506
        $region48: #{tpu_custom_call.1} parent=43 // pred_fallthru
          _
      $region44: #{tpu_custom_call.1} parent=5 // pred_fallthru
        _
    $region6: #{tpu_custom_call.1} parent=1 // loop_footer
      %s17 = sadd.s32 1, %s13
    $region7: #{tpu_custom_call.1} parent=1 // loop_footer_branch
      %12 = sbr.rel target = $region3
    $region8: #{tpu_custom_call.1} parent=1 // loop_exit
      _
    %508 = vsyncpa [#allocation4], 1
    %s509 = scalar_lea.sflag [#allocation4], 1
    %510 = vsyncpa %s509, 1

</llo_original>
